<compile_context>
chip_gen: v7x
topology: tpu7x:2x2x1
jax: 0.10.0
libtpu: 0.0.40
codegen_flags: <defaults>
</compile_context>

<pallas_src>
import math

import jax
import jax.numpy as jnp
import numpy as np
from jax.experimental import pallas as pl
from jax.experimental.pallas import tpu as pltpu


# ---------------------------------------------------------------------------
# Tree -> weight construction (host-side, mirrors the torch module init)
# ---------------------------------------------------------------------------
def _get_nodes_to_leaves(nodes, root=1, mapping=None):
    if mapping is None:
        mapping = {0: [0]}
    mapping[root] = []
    if root in nodes:
        for child in nodes[root]:
            _get_nodes_to_leaves(nodes, root=child, mapping=mapping)
            mapping[root].extend(mapping[child])
    else:
        mapping[root].append(root)
    return mapping


def build_root_to_leaf_weight_np(tree, leaves, n_nodes, dtype=np.float32):
    """Binary (n_leaves, n_nodes) matrix: W[leaf, node] = 1 iff leaf is under node."""
    leaf_index = {leaf: i for i, leaf in enumerate(leaves)}
    w = np.zeros((len(leaves), n_nodes), dtype=dtype)
    for node, tips in _get_nodes_to_leaves(tree).items():
        for leaf in tips:
            w[leaf_index[leaf], node] = 1.0
    return w


# ---------------------------------------------------------------------------
# Small integer helpers
# ---------------------------------------------------------------------------
def _cdiv(a, b):
    return -(-a // b)


def _round_up(x, m):
    return _cdiv(x, m) * m


def _balanced_tile(dim, max_tile, align):
    """Full-extent block if the dim fits (always layout-legal), else an
    `align`-aligned tile chosen so all cdiv(dim, tile) blocks are balanced."""
    if dim <= max_tile:
        return dim
    n_blocks = _cdiv(dim, max_tile)
    return _round_up(_cdiv(dim, n_blocks), align)


# ---------------------------------------------------------------------------
# Pallas kernels:  out = X @ W^T  (f32 accumulation on the MXU)
# ---------------------------------------------------------------------------
def _matmul_kernel_single(x_ref, w_ref, o_ref):
    # Whole reduction in one step: no accumulator, no phase gating.
    o_ref[...] = jnp.dot(
        x_ref[...], w_ref[...], preferred_element_type=jnp.float32
    ).astype(o_ref.dtype)


def _matmul_kernel_acc_out(x_ref, w_ref, o_ref):
    # o_ref is f32 and resident across the k axis (its index_map ignores k),
    # so it doubles as the accumulator -> no extra VMEM, no finalize copy.
    @pl.when(pl.program_id(2) == 0)
    def _init():
        o_ref[...] = jnp.zeros_like(o_ref)

    o_ref[...] += jnp.dot(
        x_ref[...], w_ref[...], preferred_element_type=jnp.float32
    )


def _matmul_kernel_acc_scratch(x_ref, w_ref, o_ref, acc_ref):
    @pl.when(pl.program_id(2) == 0)
    def _init():
        acc_ref[...] = jnp.zeros_like(acc_ref)

    acc_ref[...] += jnp.dot(
        x_ref[...], w_ref[...], preferred_element_type=jnp.float32
    )

    @pl.when(pl.program_id(2) == pl.num_programs(2) - 1)
    def _finalize():
        o_ref[...] = acc_ref[...].astype(o_ref.dtype)


def root_to_leaf_matmul(x2d, w_t, *, tk, tm_max=512, tn_max=512, out_dtype=None):
    """out = x2d @ w_t.

    x2d: (M, Jp); w_t: (Jp, K) already transposed / dtype-matched / J-padded.
    `tk` must divide Jp exactly (caller guarantees).  M and K are NOT padded:
    Pallas masks the partial edge-block writebacks along those axes.
    """
    M, Jp = x2d.shape
    Jw, K = w_t.shape
    assert Jw == Jp and Jp % tk == 0, (Jw, Jp, tk)
    out_dtype = jnp.dtype(out_dtype) if out_dtype is not None else x2d.dtype

    tm = _balanced_tile(M, tm_max, 8)
    tn = _balanced_tile(K, tn_max, 128)
    # v7x has 2 TensorCores: give a "parallel" axis >= 2 blocks for non-tiny
    # problems so both cores get work (harmless extra grid step on v5e/v6e).
    if _cdiv(M, tm) * _cdiv(K, tn) == 1 and M >= 256:
        tm = _round_up(_cdiv(M, 2), 8)

    mi, ki, kk = _cdiv(M, tm), _cdiv(K, tn), Jp // tk

    bytes_acc = (M * Jp + Jp * K) * x2d.dtype.itemsize + M * K * out_dtype.itemsize
    cost = pl.CostEstimate(
        flops=2 * M * Jp * K, transcendentals=0, bytes_accessed=bytes_acc
    )

    if kk == 1:
        # Fast path: whole n_nodes reduction fits one block (common taxonomy case).
        return pl.pallas_call(
            _matmul_kernel_single,
            out_shape=jax.ShapeDtypeStruct((M, K), out_dtype),
            grid_spec=pltpu.PrefetchScalarGridSpec(
                num_scalar_prefetch=0,
                grid=(mi, ki),
                in_specs=[
                    pl.BlockSpec((tm, tk), lambda i, j: (i, 0)),   # X tile
                    pl.BlockSpec((tk, tn), lambda i, j: (0, j)),   # W^T tile
                ],
                out_specs=pl.BlockSpec((tm, tn), lambda i, j: (i, j)),
            ),
            compiler_params=pltpu.CompilerParams(
                dimension_semantics=("parallel", "parallel"),
            ),
            cost_estimate=cost,
        )(x2d, w_t)

    acc_in_out = out_dtype == jnp.dtype(jnp.float32)
    kernel = _matmul_kernel_acc_out if acc_in_out else _matmul_kernel_acc_scratch
    scratch = [] if acc_in_out else [pltpu.VMEM((tm, tn), jnp.float32)]

    return pl.pallas_call(
        kernel,
        out_shape=jax.ShapeDtypeStruct((M, K), out_dtype),
        grid_spec=pltpu.PrefetchScalarGridSpec(
            num_scalar_prefetch=0,
            grid=(mi, ki, kk),
            in_specs=[
                pl.BlockSpec((tm, tk), lambda i, j, k: (i, k)),    # X tile
                pl.BlockSpec((tk, tn), lambda i, j, k: (k, j)),    # W^T tile
            ],
            out_specs=pl.BlockSpec((tm, tn), lambda i, j, k: (i, j)),
            scratch_shapes=scratch,
        ),
        compiler_params=pltpu.CompilerParams(
            dimension_semantics=("parallel", "parallel", "arbitrary"),
        ),
        cost_estimate=cost,
    )(x2d, w_t)


# ---------------------------------------------------------------------------
# Module-equivalent wrapper: weight prepared ONCE at init
# ---------------------------------------------------------------------------
class MatrixRootToLeafSums:
    """JAX/Pallas equivalent of the torch module (forward pass only)."""

    def __init__(self, tree, leaves, n_nodes, *, dtype=jnp.float32,
                 tm=512, tn=512, tk=1024):
        self.n_nodes = n_nodes
        self.n_leaves = len(leaves)
        self.tm_max, self.tn_max = tm, tn

        w = build_root_to_leaf_weight_np(tree, leaves, n_nodes)   # (K, J)
        w_t = np.ascontiguousarray(w.T)                           # (J, K)

        # Decide the reduction tiling once.  If n_nodes fits one block we take
        # the no-accumulator fast path; otherwise pad J (init-time, one-off) to
        # a multiple of a balanced 128-aligned tk so edge blocks never read
        # garbage along the reduction axis.
        if n_nodes <= tk:
            self.tk, self.j_padded = n_nodes, n_nodes
        else:
            n_blocks = _cdiv(n_nodes, tk)
            self.tk = _round_up(_cdiv(n_nodes, n_blocks), 128)
            self.j_padded = _round_up(n_nodes, self.tk)
            w_t = np.pad(w_t, ((0, self.j_padded - n_nodes), (0, 0)))

        # dtype=jnp.bfloat16 is lossless for W (entries are 0/1) and enables
        # the fast bf16 MXU path; the f32 default keeps torch-exact math.
        self.w_t = jnp.asarray(w_t, dtype=dtype)

    def __call__(self, x):
        *lead, J = x.shape
        assert J == self.n_nodes, (J, self.n_nodes)
        M = math.prod(lead) if lead else 1
        x2d = x.reshape(M, J).astype(self.w_t.dtype)
        if self.j_padded > J:
            # Only hit for very large taxonomies (n_nodes > tk_max).
            x2d = jnp.pad(x2d, ((0, 0), (0, self.j_padded - J)))
        out2d = root_to_leaf_matmul(
            x2d, self.w_t, tk=self.tk,
            tm_max=self.tm_max, tn_max=self.tn_max, out_dtype=x.dtype,
        )
        return out2d.reshape(*lead, self.n_leaves)


# ---------------------------------------------------------------------------
# Self-test
# ---------------------------------------------------------------------------
if __name__ == "__main__":
    key = jax.random.PRNGKey(0)
    k1, k2 = jax.random.split(key)

    # --- Test 1: small taxonomy, shapes matching the module's typical use ---
    # 1 -> (2, 3), 2 -> (4, 5), 3 -> (6, 7); node 0 = unclassified.
    tree = {1: [2, 3], 2: [4, 5], 3: [6, 7]}
    leaves = [0, 4, 5, 6, 7]
    n_nodes = 8

    module = MatrixRootToLeafSums(tree, leaves, n_nodes)
    weight = jnp.asarray(build_root_to_leaf_weight_np(tree, leaves, n_nodes))

    B, S = 2, 8
    x = jax.random.normal(k1, (B, S, n_nodes), dtype=jnp.float32)

    out = jax.block_until_ready(module(x))
    ref = jnp.einsum("...j,kj->...k", x, weight)
    assert out.shape == (B, S, len(leaves)), out.shape
    assert jnp.allclose(out, ref, atol=1e-5, rtol=1e-5), (
        f"max abs err {jnp.max(jnp.abs(out - ref))}"
    )

    # --- Test 2: ragged sizes exercising the no-pad cdiv edge blocks --------
    # Heap-shaped tree: internal nodes 1..99, leaf nodes 100..199, plus leaf 0.
    tree2 = {i: [2 * i, 2 * i + 1] for i in range(1, 100)}
    leaves2 = [0] + list(range(100, 200))
    n_nodes2 = 200

    module2 = MatrixRootToLeafSums(tree2, leaves2, n_nodes2)
    weight2 = jnp.asarray(build_root_to_leaf_weight_np(tree2, leaves2, n_nodes2))

    B2, S2 = 3, 100                                  # M = 300 (not a tile multiple)
    x2 = jax.random.normal(k2, (B2, S2, n_nodes2), dtype=jnp.float32)

    out2 = jax.block_until_ready(module2(x2))
    ref2 = jnp.einsum("...j,kj->...k", x2, weight2)
    assert out2.shape == (B2, S2, len(leaves2)), out2.shape
    assert jnp.allclose(out2, ref2, atol=2e-3, rtol=2e-3), (
        f"max abs err {jnp.max(jnp.abs(out2 - ref2))}"
    )

    print("KERNEL_OK")
</pallas_src>

<mosaic_0001>
module attributes {stable_mosaic.version = 11 : i64} {
  func.func @_matmul_kernel_single(%arg0: i32, %arg1: i32, %arg2: memref<16x8xf32, #tpu.memory_space<vmem>>, %arg3: memref<8x5xf32, #tpu.memory_space<vmem>>, %arg4: memref<16x5xf32, #tpu.memory_space<vmem>>) attributes {dimension_semantics = [#tpu.dimension_semantics<parallel>, #tpu.dimension_semantics<parallel>], iteration_bounds = array<i64: 1, 1>, scalar_prefetch = 0 : i64, scratch_operands = 0 : i64, tpu.core_type = #tpu.core_type<tc>, window_params = [{transform_indices = @transform_0, window_bounds = array<i64: 16, 8>}, {transform_indices = @transform_1, window_bounds = array<i64: 8, 5>}, {transform_indices = @transform_2, window_bounds = array<i64: 16, 5>}]} {
    %c0 = arith.constant 0 : index
    %c0_0 = arith.constant 0 : index
    %0 = vector.load %arg2[%c0, %c0_0] : memref<16x8xf32, #tpu.memory_space<vmem>>, vector<16x8xf32>
    %c0_1 = arith.constant 0 : index
    %c0_2 = arith.constant 0 : index
    %1 = vector.load %arg3[%c0_1, %c0_2] : memref<8x5xf32, #tpu.memory_space<vmem>>, vector<8x5xf32>
    %cst = arith.constant dense<0.000000e+00> : vector<16x5xf32>
    %2 = tpu.matmul %0, %1, %cst {dimension_numbers = #tpu.dot_dimension_numbers<[1], [0], [0], [1], [0, 0, 1, 1], [], []>} : vector<16x8xf32>, vector<8x5xf32>, vector<16x5xf32> -> vector<16x5xf32>
    %c0_3 = arith.constant 0 : index
    %c0_4 = arith.constant 0 : index
    %3 = vector.load %arg4[%c0_3, %c0_4] : memref<16x5xf32, #tpu.memory_space<vmem>>, vector<16x5xf32>
    tpu.vector_store %arg4[%c0_3, %c0_4], %2 {strides = array<i32>} : memref<16x5xf32, #tpu.memory_space<vmem>>, vector<16x5xf32>,
    return
  }
  func.func @transform_0(%arg0: i32, %arg1: i32) -> (i32, i32) {
    %c0_i32 = arith.constant 0 : i32
    %c0_i32_0 = arith.constant 0 : i32
    return %arg0, %c0_i32 : i32, i32
  }
  func.func @transform_1(%arg0: i32, %arg1: i32) -> (i32, i32) {
    %c0_i32 = arith.constant 0 : i32
    %c0_i32_0 = arith.constant 0 : i32
    return %c0_i32, %arg1 : i32, i32
  }
  func.func @transform_2(%arg0: i32, %arg1: i32) -> (i32, i32) {
    %c0_i32 = arith.constant 0 : i32
    return %arg0, %arg1 : i32, i32
  }
}

</mosaic_0001>

<llo_original>
// kernel: tpu_custom_call.1
$region0: #{tpu_custom_call.1}
  #allocation0 [shape = 'u32[]', space=smem, size = 0x4, offset = 0x4, fixed_abs, tag = 'smem constant byte address 0x4 - core index']
  #allocation1 [shape = 'u32[144,128]{1,0:T(1,128)}', space=vmem, size = 0x12000, scoped, tag = 'internal scratch']
  %s0 = inlined_call_operand.vmem [shape: f32[16,8], index: 0, kind: input, shape index: {}]
  %s1 = inlined_call_operand.vmem [shape: f32[8,5], index: 1, kind: input, shape index: {}]
  %s2 = inlined_call_operand.vmem [shape: f32[16,5], index: 2, kind: output, shape index: {}]
  %s3 = sld [smem:[#allocation0]]
  $region18: #{tpu_custom_call.1} parent=0
    _
  %s5 = ssub.s32 1, %s3
  %s6 = scalar_select 0, %s5, %s3
  // Predicated region
  $region2: #{tpu_custom_call.1} parent=0 // pred_check
    _
  $region3: #{tpu_custom_call.1} parent=0 // pred_check_branch
    %8 = sbr.rel (0) target = $region5
  $region4: #{tpu_custom_call.1} parent=0 // pred_region
    _
  $region5: #{tpu_custom_call.1} parent=0 // pred_fallthru
    _
  // Predicated region
  $region6: #{tpu_custom_call.1} parent=0 // pred_check
    _
  $region7: #{tpu_custom_call.1} parent=0 // pred_check_branch
    %10 = sbr.rel (0) target = $region9
  $region8: #{tpu_custom_call.1} parent=0 // pred_region
    _
  $region9: #{tpu_custom_call.1} parent=0 // pred_fallthru
    _
  %v11 = vld [vmem:[%s0] sm:$0xff]
  %v12 = vld [vmem:[%s0 + $0x8] sm:$0xff]
  %v13 = vld [vmem:[%s1] sm:$0xff]
  %vm14 = vcmask 64512
  %v16 = vsel %vm14, %v11, 0
  %v19 = vsel %vm14, %v12, 0
  %21 = vmatprep.subr.mxu0 0.0
  %22 = vmatpush1.msra.mxu0 %v13
  %23 = vmatprep.subr.mxu0 0.0
  %24 = vmatpush1.msra.mxu0 0.0
  %25 = vmatprep.subr.mxu0 0.0
  %26 = vmatpush1.msra.mxu0 0.0
  %27 = vmatprep.subr.mxu0 0.0
  %28 = vmatpush1.msra.mxu0 0.0
  %29 = vmatprep.subr.mxu0 0.0
  %30 = vmatpush1.msra.mxu0 0.0
  %31 = vmatprep.subr.mxu0 0.0
  %32 = vmatpush1.msra.mxu0 0.0
  %33 = vmatprep.subr.mxu0 0.0
  %34 = vmatpush1.msra.mxu0 0.0
  %35 = vmatprep.subr.mxu0 0.0
  %36 = vmatpush1.msra.mxu0 0.0
  %37 = vmatprep.subr.mxu0 0.0
  %38 = vmatpush1.msra.mxu0 0.0
  %39 = vmatprep.subr.mxu0 0.0
  %40 = vmatpush1.msra.mxu0 0.0
  %41 = vmatprep.subr.mxu0 0.0
  %42 = vmatpush1.msra.mxu0 0.0
  %43 = vmatprep.subr.mxu0 0.0
  %44 = vmatpush1.msra.mxu0 0.0
  %45 = vmatprep.subr.mxu0 0.0
  %46 = vmatpush1.msra.mxu0 0.0
  %47 = vmatprep.subr.mxu0 0.0
  %48 = vmatpush1.msra.mxu0 0.0
  %49 = vmatprep.subr.mxu0 0.0
  %50 = vmatpush1.msra.mxu0 0.0
  %51 = vmatprep.subr.mxu0 0.0
  %52 = vmatpush1.msra.mxu0 0.0
  %53 = vmatprep.subr.mxu0 0.0
  %54 = vmatpush1.msra.mxu0 0.0
  %55 = vmatprep.subr.mxu0 0.0
  %56 = vmatpush1.msra.mxu0 0.0
  %57 = vmatprep.subr.mxu0 0.0
  %58 = vmatpush1.msra.mxu0 0.0
  %59 = vmatprep.subr.mxu0 0.0
  %60 = vmatpush1.msra.mxu0 0.0
  %61 = vmatprep.subr.mxu0 0.0
  %62 = vmatpush1.msra.mxu0 0.0
  %63 = vmatprep.subr.mxu0 0.0
  %64 = vmatpush1.msra.mxu0 0.0
  %65 = vmatprep.subr.mxu0 0.0
  %66 = vmatpush1.msra.mxu0 0.0
  %67 = vmatprep.subr.mxu0 0.0
  %68 = vmatpush1.msra.mxu0 0.0
  %69 = vmatprep.subr.mxu0 0.0
  %70 = vmatpush1.msra.mxu0 0.0
  %71 = vmatprep.subr.mxu0 0.0
  %72 = vmatpush1.msra.mxu0 0.0
  %73 = vmatprep.subr.mxu0 0.0
  %74 = vmatpush1.msra.mxu0 0.0
  %75 = vmatprep.subr.mxu0 0.0
  %76 = vmatpush1.msra.mxu0 0.0
  %77 = vmatprep.subr.mxu0 0.0
  %78 = vmatpush1.msra.mxu0 0.0
  %79 = vmatprep.subr.mxu0 0.0
  %80 = vmatpush1.msra.mxu0 0.0
  %81 = vmatprep.subr.mxu0 0.0
  %82 = vmatpush1.msra.mxu0 0.0
  %83 = vmatprep.subr.mxu0 0.0
  %84 = vmatpush1.msra.mxu0 0.0
  %85 = vmatprep.mubr.f32.mxu0 0.0
  %86 = vmatmul.mubr.f32.gmra.mrb[0].mxu0 %v16
  %v87 = vpop.f32.mrb[0].mxu0
  %v88 = vadd.f32 0.0, %v87
  %v89 = vpop.f32.mrb[0].mxu0
  %90 = vmatprep.mubr.f32.mxu0 0.0
  %91 = vmatmul.mubr.f32.gmra.mrb[0].mxu0 %v19
  %v92 = vpop.f32.mrb[0].mxu0
  %v93 = vadd.f32 0.0, %v92
  %v94 = vpop.f32.mrb[0].mxu0
  %95 = vdwg.mxu0
  %vm96 = vcmask 39936
  %97 = vst.msk [vmem:[%s2] sm:$0xff] %vm96, %v88
  %98 = vst.msk [vmem:[%s2 + $0x8] sm:$0xff] %vm96, %v93
  // Predicated region
  $region10: #{tpu_custom_call.1} parent=0 // pred_check
    _
  $region11: #{tpu_custom_call.1} parent=0 // pred_check_branch
    %100 = sbr.rel (0) target = $region13
  $region12: #{tpu_custom_call.1} parent=0 // pred_region
    _
  $region13: #{tpu_custom_call.1} parent=0 // pred_fallthru
    _
  // Predicated region
  $region14: #{tpu_custom_call.1} parent=0 // pred_check
    _
  $region15: #{tpu_custom_call.1} parent=0 // pred_check_branch
    %102 = sbr.rel (0) target = $region17
  $region16: #{tpu_custom_call.1} parent=0 // pred_region
    _
  $region17: #{tpu_custom_call.1} parent=0 // pred_fallthru
    _

</llo_original>
